<compile_context>
chip_gen: v5e
topology: v5e:2x2
jax: 0.10.0
libtpu: 0.0.40
codegen_flags: <defaults>
</compile_context>

<pallas_src>
import functools

import jax
import jax.numpy as jnp
from jax.experimental import pallas as pl
from jax.experimental.pallas import tpu as pltpu

BN_EPS = 1e-5


def _round_up(n, m):
    return ((n + m - 1) // m) * m


def _gelu(x, approximate=False):
    if approximate:
        # tanh approximation -> EUP slot (frees VALU); ~1e-3 deviation from exact.
        return jax.nn.gelu(x, approximate=True)
    # PyTorch nn.GELU() default: 0.5 * x * (1 + erf(x / sqrt(2)))
    return 0.5 * x * (1.0 + jax.lax.erf(x * 0.7071067811865476))


def mlp_kernel(x_ref, w1_ref, w2_ref, w3_ref, bias_ref, out_ref, *, approx_gelu=False):
    """Fused 3-layer MLP. BN folded into w/b; all dims lane-padded to 128."""
    h_pad = w1_ref.shape[1]      # padded hidden size
    c_pad = w3_ref.shape[1]      # padded num_classes

    bias = bias_ref[...]         # (8, slab_w) f32 — one read
    b1 = bias[0:1, :h_pad]
    b2 = bias[1:2, :h_pad]
    b3 = bias[2:3, :c_pad]

    # Matmul operands in weight dtype (f32 or bf16); accumulation + elementwise
    # math in f32 (v5e-friendly: no bf16 VPU/EUP there).
    x = x_ref[...].astype(w1_ref.dtype)

    # fc1 (+ folded bn1) + GELU.    dropout(p=0.2): identity in eval mode.
    z1 = jnp.dot(x, w1_ref[...], preferred_element_type=jnp.float32) + b1
    h1 = _gelu(z1, approx_gelu)

    # fc2 (+ folded bn2) + GELU.    dropout(p=0.2): identity in eval mode.
    z2 = jnp.dot(h1.astype(w2_ref.dtype), w2_ref[...],
                 preferred_element_type=jnp.float32) + b2
    h2 = _gelu(z2, approx_gelu)

    # fc3 (lane-dense padded output columns).
    out_ref[...] = (jnp.dot(h2.astype(w3_ref.dtype), w3_ref[...],
                            preferred_element_type=jnp.float32) + b3
                    ).astype(out_ref.dtype)


def prepare_params(params, *, weights_dtype=jnp.float32):
    """ONE-TIME preparation: fold BN (eval mode) into the linears, zero-pad every
    dimension to a multiple of 128, pack the three bias vectors into one
    (8, slab_w) slab, and cast weights.  Call once and reuse the result."""
    f32 = jnp.float32
    in_size, hidden = params["w1"].shape
    num_classes = params["w3"].shape[1]
    in_pad = _round_up(in_size, 128)
    h_pad = _round_up(hidden, 128)
    c_pad = _round_up(num_classes, 128)

    # Fold BatchNorm running stats + affine into W', b'.
    s1 = params["g1"] * jax.lax.rsqrt(params["rv1"] + BN_EPS)            # (1, H)
    w1f = params["w1"] * s1
    b1f = (params["b1"] - params["rm1"]) * s1 + params["be1"]

    s2 = params["g2"] * jax.lax.rsqrt(params["rv2"] + BN_EPS)            # (1, H)
    w2f = params["w2"] * s2
    b2f = (params["b2"] - params["rm2"]) * s2 + params["be2"]

    # Zero-pad (exact: padded weight rows/cols are zero; GELU(0) = 0).
    w1p = jnp.pad(w1f, ((0, in_pad - in_size), (0, h_pad - hidden)))
    w2p = jnp.pad(w2f, ((0, h_pad - hidden), (0, h_pad - hidden)))
    w3p = jnp.pad(params["w3"], ((0, h_pad - hidden), (0, c_pad - num_classes)))

    # One (8, slab_w) f32 bias slab -> single aligned DMA in the kernel.
    slab_w = max(h_pad, c_pad)
    bias_slab = jnp.zeros((8, slab_w), f32)
    bias_slab = bias_slab.at[0, :hidden].set(b1f[0].astype(f32))
    bias_slab = bias_slab.at[1, :hidden].set(b2f[0].astype(f32))
    bias_slab = bias_slab.at[2, :num_classes].set(params["b3"][0].astype(f32))

    return dict(
        w1=w1p.astype(weights_dtype),   # (in_pad, h_pad)
        w2=w2p.astype(weights_dtype),   # (h_pad, h_pad)
        w3=w3p.astype(weights_dtype),   # (h_pad, c_pad)
        bias=bias_slab,                 # (8, slab_w) f32
        in_size=int(in_size),
        num_classes=int(num_classes),
    )


def neural_net_forward(x, prepared, *, tile_b=512, out_dtype=jnp.float32,
                       single_buffer_weights=True, approx_gelu=False):
    """Eval-mode NeuralNet forward as a single fused Pallas kernel.

    `prepared` comes from prepare_params() (one-time).  Per-call wrapper work is
    only: cast/pad x and slice the padding off the result.
    """
    w1, w2, w3, bias = prepared["w1"], prepared["w2"], prepared["w3"], prepared["bias"]
    in_pad, h_pad = w1.shape
    c_pad = w3.shape[1]
    slab_w = bias.shape[1]
    num_classes = prepared["num_classes"]
    batch, in_size = x.shape
    assert in_size == prepared["in_size"], "x feature dim mismatch with prepared params"

    # Stream x in the weights' dtype (bf16 halves the input DMA bytes on v6e/v7x).
    x_dtype = jnp.bfloat16 if w1.dtype == jnp.bfloat16 else x.dtype
    sub = 16 if x_dtype == jnp.bfloat16 else 8            # sublane packing

    # Batch tiling: big tiles (per-step overhead ~0.35 us), but keep >=2 parallel
    # grid steps when the batch can be split so v7x's two TensorCores both work.
    tile_b = max(sub, min(int(tile_b), 1024))
    tb = _round_up(min(tile_b, _round_up(batch, sub)), sub)
    if batch >= 2 * sub and _round_up(batch, tb) // tb < 2:
        tb = _round_up((batch + 1) // 2, sub)
    padded_batch = _round_up(batch, tb)
    grid = (padded_batch // tb,)

    x = x.astype(x_dtype)
    if padded_batch != batch or in_pad != in_size:
        x = jnp.pad(x, ((0, padded_batch - batch), (0, in_pad - in_size)))

    # VMEM budget: weights (2-buffer worst case) + bias + double-buffered x/out
    # tiles + f32 intermediates, 2x margin, capped at 48 MiB (< v7x's 64 MiB).
    wbytes = jnp.dtype(w1.dtype).itemsize
    xbytes = jnp.dtype(x_dtype).itemsize
    obytes = jnp.dtype(out_dtype).itemsize
    est = ((in_pad * h_pad + h_pad * h_pad + h_pad * c_pad) * wbytes * 2
           + 8 * slab_w * 4 * 2
           + (tb * in_pad * xbytes + tb * c_pad * obytes) * 2
           + tb * h_pad * 4 * 4)
    vmem_limit = int(min(max(2 * est, 32 * 1024 * 1024), 48 * 1024 * 1024))

    kernel = functools.partial(mlp_kernel, approx_gelu=approx_gelu)

    def make_specs(buffer_once):
        # Constant index_map -> weights stay VMEM-resident; single-buffer them so
        # they don't pay a 2x VMEM footprint (matters once hidden grows on v7x).
        res = dict(pipeline_mode=pl.Buffered(1)) if buffer_once else {}
        return [
            pl.BlockSpec((tb, in_pad), lambda i: (i, 0)),            # x: batch-tiled
            pl.BlockSpec((in_pad, h_pad), lambda i: (0, 0), **res),  # w1 resident
            pl.BlockSpec((h_pad, h_pad), lambda i: (0, 0), **res),   # w2 resident
            pl.BlockSpec((h_pad, c_pad), lambda i: (0, 0), **res),   # w3 resident
            pl.BlockSpec((8, slab_w), lambda i: (0, 0), **res),      # bias slab
        ]

    def run(buffer_once):
        return pl.pallas_call(
            kernel,
            out_shape=jax.ShapeDtypeStruct((padded_batch, c_pad), out_dtype),
            grid=grid,
            in_specs=make_specs(buffer_once),
            out_specs=pl.BlockSpec((tb, c_pad), lambda i: (i, 0)),
            compiler_params=pltpu.CompilerParams(
                dimension_semantics=("parallel",),
                vmem_limit_bytes=vmem_limit,
            ),
        )(x, w1, w2, w3, bias)

    if single_buffer_weights:
        try:
            out = run(True)
        except Exception:
            # Pallas build without BlockSpec(pipeline_mode=...): use default buffering.
            out = run(False)
    else:
        out = run(False)

    # Strip batch / lane padding outside the kernel.
    return out[:batch, :num_classes]


def neural_net_reference(x, p):
    """Pure-JAX reference (un-folded BN) matching PyTorch eval-mode forward."""
    def bn(z, g, be, rm, rv):
        return (z - rm) * jax.lax.rsqrt(rv + BN_EPS) * g + be

    z1 = _gelu(bn(x @ p["w1"] + p["b1"], p["g1"], p["be1"], p["rm1"], p["rv1"]))
    z2 = _gelu(bn(z1 @ p["w2"] + p["b2"], p["g2"], p["be2"], p["rm2"], p["rv2"]))
    return z2 @ p["w3"] + p["b3"]


def init_params(key, input_size, hidden_size, num_classes):
    ks = jax.random.split(key, 16)
    f32 = jnp.float32

    def dense(kw, kb, fan_in, fan_out):
        # Linear weight stored transposed: [in, out]
        w = jax.random.normal(kw, (fan_in, fan_out), f32) * 0.1
        b = jax.random.normal(kb, (1, fan_out), f32) * 0.05
        return w, b

    w1, b1 = dense(ks[0], ks[1], input_size, hidden_size)
    w2, b2 = dense(ks[2], ks[3], hidden_size, hidden_size)
    w3, b3 = dense(ks[4], ks[5], hidden_size, num_classes)

    def bn_params(kg, kb, km, kv, n):
        g = 1.0 + 0.1 * jax.random.normal(kg, (1, n), f32)
        be = 0.1 * jax.random.normal(kb, (1, n), f32)
        rm = 0.1 * jax.random.normal(km, (1, n), f32)
        rv = 0.5 + jnp.abs(jax.random.normal(kv, (1, n), f32)) * 0.2
        return g, be, rm, rv

    g1, be1, rm1, rv1 = bn_params(ks[6], ks[7], ks[8], ks[9], hidden_size)
    g2, be2, rm2, rv2 = bn_params(ks[10], ks[11], ks[12], ks[13], hidden_size)

    return dict(w1=w1, b1=b1, g1=g1, be1=be1, rm1=rm1, rv1=rv1,
                w2=w2, b2=b2, g2=g2, be2=be2, rm2=rm2, rv2=rv2,
                w3=w3, b3=b3)


if __name__ == "__main__":
    batch, input_size, hidden_size, num_classes = 8, 32, 32, 16

    key = jax.random.PRNGKey(0)
    k_x, k_p, k_x2 = jax.random.split(key, 3)
    x = jax.random.normal(k_x, (batch, input_size), jnp.float32)
    params = init_params(k_p, input_size, hidden_size, num_classes)

    # One-time parameter preparation (fold BN, pad, pack, cast) — reused across calls.
    # For v6e/v7x production, pass weights_dtype=jnp.bfloat16 (loosen the tolerance).
    prepared = prepare_params(params, weights_dtype=jnp.float32)

    out = neural_net_forward(x, prepared)
    out = jax.block_until_ready(out)

    ref = neural_net_reference(x, params)
    assert out.shape == (batch, num_classes)
    # BN folding re-associates the affine math; tolerance covers the f32 reorder.
    assert jnp.allclose(out, ref, atol=1e-4, rtol=1e-4), "kernel mismatch vs reference"

    # Exercise the multi-step (megacore-splittable) grid + batch-padding path.
    x2 = jax.random.normal(k_x2, (40, input_size), jnp.float32)
    out2 = jax.block_until_ready(neural_net_forward(x2, prepared))
    ref2 = neural_net_reference(x2, params)
    assert out2.shape == (40, num_classes)
    assert jnp.allclose(out2, ref2, atol=1e-4, rtol=1e-4), "multi-tile mismatch vs reference"

    print("KERNEL_OK")
</pallas_src>

<mosaic_0001>
module attributes {stable_mosaic.version = 11 : i64} {
  func.func @mlp_kernel(%arg0: i32, %arg1: memref<8x128xf32, #tpu.memory_space<vmem>>, %arg2: memref<128x128xf32, #tpu.memory_space<vmem>>, %arg3: memref<128x128xf32, #tpu.memory_space<vmem>>, %arg4: memref<128x128xf32, #tpu.memory_space<vmem>>, %arg5: memref<8x128xf32, #tpu.memory_space<vmem>>, %arg6: memref<8x128xf32, #tpu.memory_space<vmem>>) attributes {dimension_semantics = [#tpu.dimension_semantics<parallel>], iteration_bounds = array<i64: 1>, scalar_prefetch = 0 : i64, scratch_operands = 0 : i64, tpu.core_type = #tpu.core_type<tc>, window_params = [{transform_indices = @transform_0, window_bounds = array<i64: 8, 128>}, {pipeline_mode = #tpu.pipeline_mode<synchronous>, transform_indices = @transform_1, window_bounds = array<i64: 128, 128>}, {pipeline_mode = #tpu.pipeline_mode<synchronous>, transform_indices = @transform_2, window_bounds = array<i64: 128, 128>}, {pipeline_mode = #tpu.pipeline_mode<synchronous>, transform_indices = @transform_3, window_bounds = array<i64: 128, 128>}, {pipeline_mode = #tpu.pipeline_mode<synchronous>, transform_indices = @transform_4, window_bounds = array<i64: 8, 128>}, {transform_indices = @transform_5, window_bounds = array<i64: 8, 128>}]} {
    %c0 = arith.constant 0 : index
    %c0_0 = arith.constant 0 : index
    %0 = vector.load %arg5[%c0, %c0_0] : memref<8x128xf32, #tpu.memory_space<vmem>>, vector<8x128xf32>
    %1 = vector.extract_strided_slice %0 {offsets = [0, 0], sizes = [1, 128], strides = [1, 1]} : vector<8x128xf32> to vector<1x128xf32>
    %2 = vector.extract_strided_slice %0 {offsets = [1, 0], sizes = [1, 128], strides = [1, 1]} : vector<8x128xf32> to vector<1x128xf32>
    %3 = vector.extract_strided_slice %0 {offsets = [2, 0], sizes = [1, 128], strides = [1, 1]} : vector<8x128xf32> to vector<1x128xf32>
    %c0_1 = arith.constant 0 : index
    %c0_2 = arith.constant 0 : index
    %4 = vector.load %arg1[%c0_1, %c0_2] : memref<8x128xf32, #tpu.memory_space<vmem>>, vector<8x128xf32>
    %c0_3 = arith.constant 0 : index
    %c0_4 = arith.constant 0 : index
    %5 = vector.load %arg2[%c0_3, %c0_4] : memref<128x128xf32, #tpu.memory_space<vmem>>, vector<128x128xf32>
    %cst = arith.constant dense<0.000000e+00> : vector<8x128xf32>
    %6 = tpu.matmul %4, %5, %cst {dimension_numbers = #tpu.dot_dimension_numbers<[1], [0], [0], [1], [0, 0, 1, 1], [], []>} : vector<8x128xf32>, vector<128x128xf32>, vector<8x128xf32> -> vector<8x128xf32>
    %7 = vector.broadcast %1 : vector<1x128xf32> to vector<8x128xf32>
    %8 = arith.addf %6, %7 : vector<8x128xf32>
    %cst_5 = arith.constant 5.000000e-01 : f32
    %9 = vector.broadcast %cst_5 : f32 to vector<8x128xf32>
    %10 = arith.mulf %9, %8 : vector<8x128xf32>
    %cst_6 = arith.constant 0.707106769 : f32
    %11 = vector.broadcast %cst_6 : f32 to vector<8x128xf32>
    %12 = arith.mulf %8, %11 : vector<8x128xf32>
    %13 = math.erf %12 : vector<8x128xf32>
    %cst_7 = arith.constant 1.000000e+00 : f32
    %14 = vector.broadcast %cst_7 : f32 to vector<8x128xf32>
    %15 = arith.addf %14, %13 : vector<8x128xf32>
    %16 = arith.mulf %10, %15 : vector<8x128xf32>
    %c0_8 = arith.constant 0 : index
    %c0_9 = arith.constant 0 : index
    %17 = vector.load %arg3[%c0_8, %c0_9] : memref<128x128xf32, #tpu.memory_space<vmem>>, vector<128x128xf32>
    %cst_10 = arith.constant dense<0.000000e+00> : vector<8x128xf32>
    %18 = tpu.matmul %16, %17, %cst_10 {dimension_numbers = #tpu.dot_dimension_numbers<[1], [0], [0], [1], [0, 0, 1, 1], [], []>} : vector<8x128xf32>, vector<128x128xf32>, vector<8x128xf32> -> vector<8x128xf32>
    %19 = vector.broadcast %2 : vector<1x128xf32> to vector<8x128xf32>
    %20 = arith.addf %18, %19 : vector<8x128xf32>
    %cst_11 = arith.constant 5.000000e-01 : f32
    %21 = vector.broadcast %cst_11 : f32 to vector<8x128xf32>
    %22 = arith.mulf %21, %20 : vector<8x128xf32>
    %cst_12 = arith.constant 0.707106769 : f32
    %23 = vector.broadcast %cst_12 : f32 to vector<8x128xf32>
    %24 = arith.mulf %20, %23 : vector<8x128xf32>
    %25 = math.erf %24 : vector<8x128xf32>
    %cst_13 = arith.constant 1.000000e+00 : f32
    %26 = vector.broadcast %cst_13 : f32 to vector<8x128xf32>
    %27 = arith.addf %26, %25 : vector<8x128xf32>
    %28 = arith.mulf %22, %27 : vector<8x128xf32>
    %c0_14 = arith.constant 0 : index
    %c0_15 = arith.constant 0 : index
    %29 = vector.load %arg4[%c0_14, %c0_15] : memref<128x128xf32, #tpu.memory_space<vmem>>, vector<128x128xf32>
    %cst_16 = arith.constant dense<0.000000e+00> : vector<8x128xf32>
    %30 = tpu.matmul %28, %29, %cst_16 {dimension_numbers = #tpu.dot_dimension_numbers<[1], [0], [0], [1], [0, 0, 1, 1], [], []>} : vector<8x128xf32>, vector<128x128xf32>, vector<8x128xf32> -> vector<8x128xf32>
    %31 = vector.broadcast %3 : vector<1x128xf32> to vector<8x128xf32>
    %32 = arith.addf %30, %31 : vector<8x128xf32>
    %c0_17 = arith.constant 0 : index
    %c0_18 = arith.constant 0 : index
    %33 = vector.load %arg6[%c0_17, %c0_18] : memref<8x128xf32, #tpu.memory_space<vmem>>, vector<8x128xf32>
    tpu.vector_store %arg6[%c0_17, %c0_18], %32 {strides = array<i32>} : memref<8x128xf32, #tpu.memory_space<vmem>>, vector<8x128xf32>,
    return
  }
  func.func @transform_0(%arg0: i32) -> (i32, i32) {
    %c0_i32 = arith.constant 0 : i32
    %c0_i32_0 = arith.constant 0 : i32
    return %arg0, %c0_i32 : i32, i32
  }
  func.func @transform_1(%arg0: i32) -> (i32, i32) {
    %c0_i32 = arith.constant 0 : i32
    %c0_i32_0 = arith.constant 0 : i32
    %c0_i32_1 = arith.constant 0 : i32
    return %c0_i32, %c0_i32_0 : i32, i32
  }
  func.func @transform_2(%arg0: i32) -> (i32, i32) {
    %c0_i32 = arith.constant 0 : i32
    %c0_i32_0 = arith.constant 0 : i32
    %c0_i32_1 = arith.constant 0 : i32
    return %c0_i32, %c0_i32_0 : i32, i32
  }
  func.func @transform_3(%arg0: i32) -> (i32, i32) {
    %c0_i32 = arith.constant 0 : i32
    %c0_i32_0 = arith.constant 0 : i32
    %c0_i32_1 = arith.constant 0 : i32
    return %c0_i32, %c0_i32_0 : i32, i32
  }
  func.func @transform_4(%arg0: i32) -> (i32, i32) {
    %c0_i32 = arith.constant 0 : i32
    %c0_i32_0 = arith.constant 0 : i32
    %c0_i32_1 = arith.constant 0 : i32
    return %c0_i32, %c0_i32_0 : i32, i32
  }
  func.func @transform_5(%arg0: i32) -> (i32, i32) {
    %c0_i32 = arith.constant 0 : i32
    %c0_i32_0 = arith.constant 0 : i32
    return %arg0, %c0_i32 : i32, i32
  }
}

module attributes {stable_mosaic.version = 11 : i64} {
  func.func @mlp_kernel(%arg0: i32, %arg1: memref<8x128xf32, #tpu.memory_space<vmem>>, %arg2: memref<128x128xf32, #tpu.memory_space<vmem>>, %arg3: memref<128x128xf32, #tpu.memory_space<vmem>>, %arg4: memref<128x128xf32, #tpu.memory_space<vmem>>, %arg5: memref<8x128xf32, #tpu.memory_space<vmem>>, %arg6: memref<8x128xf32, #tpu.memory_space<vmem>>) attributes {dimension_semantics = [#tpu.dimension_semantics<parallel>], iteration_bounds = array<i64: 1>, scalar_prefetch = 0 : i64, scratch_operands = 0 : i64, tpu.core_type = #tpu.core_type<tc>, window_params = [{transform_indices = @transform_0, window_bounds = array<i64: 8, 128>}, {pipeline_mode = #tpu.pipeline_mode<synchronous>, transform_indices = @transform_1, window_bounds = array<i64: 128, 128>}, {pipeline_mode = #tpu.pipeline_mode<synchronous>, transform_indices = @transform_2, window_bounds = array<i64: 128, 128>}, {pipeline_mode = #tpu.pipeline_mode<synchronous>, transform_indices = @transform_3, window_bounds = array<i64: 128, 128>}, {pipeline_mode = #tpu.pipeline_mode<synchronous>, transform_indices = @transform_4, window_bounds = array<i64: 8, 128>}, {transform_indices = @transform_5, window_bounds = array<i64: 8, 128>}]} {
    %c0 = arith.constant 0 : index
    %c0_0 = arith.constant 0 : index
    %0 = vector.load %arg5[%c0, %c0_0] : memref<8x128xf32, #tpu.memory_space<vmem>>, vector<8x128xf32>
    %1 = vector.extract_strided_slice %0 {offsets = [0, 0], sizes = [1, 128], strides = [1, 1]} : vector<8x128xf32> to vector<1x128xf32>
    %2 = vector.extract_strided_slice %0 {offsets = [1, 0], sizes = [1, 128], strides = [1, 1]} : vector<8x128xf32> to vector<1x128xf32>
    %3 = vector.extract_strided_slice %0 {offsets = [2, 0], sizes = [1, 128], strides = [1, 1]} : vector<8x128xf32> to vector<1x128xf32>
    %c0_1 = arith.constant 0 : index
    %c0_2 = arith.constant 0 : index
    %4 = vector.load %arg1[%c0_1, %c0_2] : memref<8x128xf32, #tpu.memory_space<vmem>>, vector<8x128xf32>
    %c0_3 = arith.constant 0 : index
    %c0_4 = arith.constant 0 : index
    %5 = vector.load %arg2[%c0_3, %c0_4] : memref<128x128xf32, #tpu.memory_space<vmem>>, vector<128x128xf32>
    %cst = arith.constant dense<0.000000e+00> : vector<8x128xf32>
    %6 = tpu.matmul %4, %5, %cst {dimension_numbers = #tpu.dot_dimension_numbers<[1], [0], [0], [1], [0, 0, 1, 1], [], []>} : vector<8x128xf32>, vector<128x128xf32>, vector<8x128xf32> -> vector<8x128xf32>
    %7 = vector.broadcast %1 : vector<1x128xf32> to vector<8x128xf32>
    %8 = arith.addf %6, %7 : vector<8x128xf32>
    %cst_5 = arith.constant 5.000000e-01 : f32
    %9 = vector.broadcast %cst_5 : f32 to vector<8x128xf32>
    %10 = arith.mulf %9, %8 : vector<8x128xf32>
    %cst_6 = arith.constant 0.707106769 : f32
    %11 = vector.broadcast %cst_6 : f32 to vector<8x128xf32>
    %12 = arith.mulf %8, %11 : vector<8x128xf32>
    %13 = math.erf %12 : vector<8x128xf32>
    %cst_7 = arith.constant 1.000000e+00 : f32
    %14 = vector.broadcast %cst_7 : f32 to vector<8x128xf32>
    %15 = arith.addf %14, %13 : vector<8x128xf32>
    %16 = arith.mulf %10, %15 : vector<8x128xf32>
    %c0_8 = arith.constant 0 : index
    %c0_9 = arith.constant 0 : index
    %17 = vector.load %arg3[%c0_8, %c0_9] : memref<128x128xf32, #tpu.memory_space<vmem>>, vector<128x128xf32>
    %cst_10 = arith.constant dense<0.000000e+00> : vector<8x128xf32>
    %18 = tpu.matmul %16, %17, %cst_10 {dimension_numbers = #tpu.dot_dimension_numbers<[1], [0], [0], [1], [0, 0, 1, 1], [], []>} : vector<8x128xf32>, vector<128x128xf32>, vector<8x128xf32> -> vector<8x128xf32>
    %19 = vector.broadcast %2 : vector<1x128xf32> to vector<8x128xf32>
    %20 = arith.addf %18, %19 : vector<8x128xf32>
    %cst_11 = arith.constant 5.000000e-01 : f32
    %21 = vector.broadcast %cst_11 : f32 to vector<8x128xf32>
    %22 = arith.mulf %21, %20 : vector<8x128xf32>
    %cst_12 = arith.constant 0.707106769 : f32
    %23 = vector.broadcast %cst_12 : f32 to vector<8x128xf32>
    %24 = arith.mulf %20, %23 : vector<8x128xf32>
    %25 = math.erf %24 : vector<8x128xf32>
    %cst_13 = arith.constant 1.000000e+00 : f32
    %26 = vector.broadcast %cst_13 : f32 to vector<8x128xf32>
    %27 = arith.addf %26, %25 : vector<8x128xf32>
    %28 = arith.mulf %22, %27 : vector<8x128xf32>
    %c0_14 = arith.constant 0 : index
    %c0_15 = arith.constant 0 : index
    %29 = vector.load %arg4[%c0_14, %c0_15] : memref<128x128xf32, #tpu.memory_space<vmem>>, vector<128x128xf32>
    %cst_16 = arith.constant dense<0.000000e+00> : vector<8x128xf32>
    %30 = tpu.matmul %28, %29, %cst_16 {dimension_numbers = #tpu.dot_dimension_numbers<[1], [0], [0], [1], [0, 0, 1, 1], [], []>} : vector<8x128xf32>, vector<128x128xf32>, vector<8x128xf32> -> vector<8x128xf32>
    %31 = vector.broadcast %3 : vector<1x128xf32> to vector<8x128xf32>
    %32 = arith.addf %30, %31 : vector<8x128xf32>
    %c0_17 = arith.constant 0 : index
    %c0_18 = arith.constant 0 : index
    %33 = vector.load %arg6[%c0_17, %c0_18] : memref<8x128xf32, #tpu.memory_space<vmem>>, vector<8x128xf32>
    tpu.vector_store %arg6[%c0_17, %c0_18], %32 {strides = array<i32>} : memref<8x128xf32, #tpu.memory_space<vmem>>, vector<8x128xf32>,
    return
  }
  func.func @transform_0(%arg0: i32) -> (i32, i32) {
    %c0_i32 = arith.constant 0 : i32
    %c0_i32_0 = arith.constant 0 : i32
    return %arg0, %c0_i32 : i32, i32
  }
  func.func @transform_1(%arg0: i32) -> (i32, i32) {
    %c0_i32 = arith.constant 0 : i32
    %c0_i32_0 = arith.constant 0 : i32
    %c0_i32_1 = arith.constant 0 : i32
    return %c0_i32, %c0_i32_0 : i32, i32
  }
  func.func @transform_2(%arg0: i32) -> (i32, i32) {
    %c0_i32 = arith.constant 0 : i32
    %c0_i32_0 = arith.constant 0 : i32
    %c0_i32_1 = arith.constant 0 : i32
    return %c0_i32, %c0_i32_0 : i32, i32
  }
  func.func @transform_3(%arg0: i32) -> (i32, i32) {
    %c0_i32 = arith.constant 0 : i32
    %c0_i32_0 = arith.constant 0 : i32
    %c0_i32_1 = arith.constant 0 : i32
    return %c0_i32, %c0_i32_0 : i32, i32
  }
  func.func @transform_4(%arg0: i32) -> (i32, i32) {
    %c0_i32 = arith.constant 0 : i32
    %c0_i32_0 = arith.constant 0 : i32
    %c0_i32_1 = arith.constant 0 : i32
    return %c0_i32, %c0_i32_0 : i32, i32
  }
  func.func @transform_5(%arg0: i32) -> (i32, i32) {
    %c0_i32 = arith.constant 0 : i32
    %c0_i32_0 = arith.constant 0 : i32
    return %arg0, %c0_i32 : i32, i32
  }
}

</mosaic_0001>

<llo_original>
// kernel: tpu_custom_call.1
$region0: #{tpu_custom_call.1}
  #allocation0 [shape = 'u32[]', space=smem, size = 0x4, offset = 0x4, fixed_abs, tag = 'smem constant byte address 0x4 - core index']
  #allocation1 [shape = 'u32[72,128]{1,0:T(1,128)}', space=vmem, size = 0x9000, scoped, tag = 'internal scratch']
  %s0 = inlined_call_operand.hbm [shape: f32[8,128], index: 0, kind: input, shape index: {}]
  %s1 = inlined_call_operand.hbm [shape: f32[128,128], index: 1, kind: input, shape index: {}]
  %s2 = inlined_call_operand.hbm [shape: f32[128,128], index: 2, kind: input, shape index: {}]
  %s3 = inlined_call_operand.hbm [shape: f32[128,128], index: 3, kind: input, shape index: {}]
  %s4 = inlined_call_operand.hbm [shape: f32[8,128], index: 4, kind: input, shape index: {}]
  %s5 = inlined_call_operand.hbm [shape: f32[8,128], index: 5, kind: output, shape index: {}]
  %s6 = sld [smem:[#allocation0]]
  $region50: #{tpu_custom_call.1} parent=0
    _
  %s8 = ssub.s32 1, %s6
  %s9 = scalar_select 0, %s8, %s6
  $region1: #{tpu_custom_call.1} parent=0
    #allocation2 [shape = 'u8[4096]{0}', space=vmem, size = 0x1000, scoped, tag = 'input window, operand 0, single buffered']
    #allocation3 [shape = 's32[1]{0}', space=sflag, size = 0x4, scoped, tag = 'scoped memory for tpu_custom_call.1']
    #allocation4 [shape = 's32[1]{0}', space=sflag, size = 0x4, scoped, tag = 'scoped memory for tpu_custom_call.1']
    #allocation5 [shape = 'u8[65536]{0}', space=vmem, size = 0x10000, scoped, tag = 'input window, operand 1, single buffered']
    #allocation6 [shape = 's32[1]{0}', space=sflag, size = 0x4, scoped, tag = 'scoped memory for tpu_custom_call.1']
    #allocation7 [shape = 'u8[65536]{0}', space=vmem, size = 0x10000, scoped, tag = 'input window, operand 2, single buffered']
    #allocation8 [shape = 'u8[65536]{0}', space=vmem, size = 0x10000, scoped, tag = 'input window, operand 3, single buffered']
    #allocation9 [shape = 's32[1]{0}', space=sflag, size = 0x4, scoped, tag = 'scoped memory for tpu_custom_call.1']
    #allocation10 [shape = 'u8[4096]{0}', space=vmem, size = 0x1000, scoped, tag = 'input window, operand 4, single buffered']
    #allocation11 [shape = 'u8[4096]{0}', space=vmem, size = 0x1000, scoped, tag = 'output window, operand 0, single buffered']
    %10 = vsyncpa [#allocation3], 0
    %11 = vsyncpa [#allocation6], 0
    %12 = vsyncpa [#allocation9], 0
    %13 = vsyncpa [#allocation4], 0
    // Predicated region
    $region2: #{tpu_custom_call.1} parent=1 // pred_check
      _
    $region3: #{tpu_custom_call.1} parent=1 // pred_check_branch
      %15 = sbr.rel (0) target = $region5
    $region4: #{tpu_custom_call.1} parent=1 // pred_region
      %17 = vsyncadd [#allocation3], 0
      %s19 = sshll.u32 %s0, 4
      %s20 = int_to_ptr.hbm [resolvable:$true] %s19
      %s21 = sshll.u32 [#allocation2], 4
      %s22 = int_to_ptr.vmem [resolvable:$true] %s21
      %24 = dma.hbm_to_vmem [thread:$0]  %s20, 128, %s22, [#allocation3]
    $region5: #{tpu_custom_call.1} parent=1 // pred_fallthru
      _
    // Predicated region
    $region6: #{tpu_custom_call.1} parent=1 // pred_check
      _
    $region7: #{tpu_custom_call.1} parent=1 // pred_check_branch
      %26 = sbr.rel (0) target = $region9
    $region8: #{tpu_custom_call.1} parent=1 // pred_region
      %28 = vsyncadd [#allocation6], 0
      %s29 = sshll.u32 %s1, 4
      %s30 = int_to_ptr.hbm [resolvable:$true] %s29
      %s31 = sshll.u32 [#allocation5], 4
      %s32 = int_to_ptr.vmem [resolvable:$true] %s31
      %37 = dma.hbm_to_vmem [thread:$0]  %s30, 2048, %s32, [#allocation6], 128, 128, 8
    $region9: #{tpu_custom_call.1} parent=1 // pred_fallthru
      _
    // Predicated region
    $region10: #{tpu_custom_call.1} parent=1 // pred_check
      _
    $region11: #{tpu_custom_call.1} parent=1 // pred_check_branch
      %39 = sbr.rel (0) target = $region13
    $region12: #{tpu_custom_call.1} parent=1 // pred_region
      %41 = vsyncadd [#allocation6], 0
      %s42 = sshll.u32 %s2, 4
      %s43 = int_to_ptr.hbm [resolvable:$true] %s42
      %s44 = sshll.u32 [#allocation7], 4
      %s45 = int_to_ptr.vmem [resolvable:$true] %s44
      %50 = dma.hbm_to_vmem [thread:$0]  %s43, 2048, %s45, [#allocation6], 128, 128, 8
    $region13: #{tpu_custom_call.1} parent=1 // pred_fallthru
      _
    // Predicated region
    $region14: #{tpu_custom_call.1} parent=1 // pred_check
      _
    $region15: #{tpu_custom_call.1} parent=1 // pred_check_branch
      %52 = sbr.rel (0) target = $region17
    $region16: #{tpu_custom_call.1} parent=1 // pred_region
      %54 = vsyncadd [#allocation9], 0
      %s55 = sshll.u32 %s3, 4
      %s56 = int_to_ptr.hbm [resolvable:$true] %s55
      %s57 = sshll.u32 [#allocation8], 4
      %s58 = int_to_ptr.vmem [resolvable:$true] %s57
      %63 = dma.hbm_to_vmem [thread:$0]  %s56, 2048, %s58, [#allocation9], 128, 128, 8
    $region17: #{tpu_custom_call.1} parent=1 // pred_fallthru
      _
    // Predicated region
    $region18: #{tpu_custom_call.1} parent=1 // pred_check
      _
    $region19: #{tpu_custom_call.1} parent=1 // pred_check_branch
      %65 = sbr.rel (0) target = $region21
    $region20: #{tpu_custom_call.1} parent=1 // pred_region
      %67 = vsyncadd [#allocation9], 0
      %s69 = sshll.u32 %s4, 4
      %s70 = int_to_ptr.hbm [resolvable:$true] %s69
      %s71 = sshll.u32 [#allocation10], 4
      %s72 = int_to_ptr.vmem [resolvable:$true] %s71
      %74 = dma.hbm_to_vmem [thread:$0]  %s70, 128, %s72, [#allocation9]
    $region21: #{tpu_custom_call.1} parent=1 // pred_fallthru
      _
    // Predicated region
    $region22: #{tpu_custom_call.1} parent=1 // pred_check
      _
    $region23: #{tpu_custom_call.1} parent=1 // pred_check_branch
      %76 = sbr.rel (0) target = $region25
    $region24: #{tpu_custom_call.1} parent=1 // pred_region
      %78 = dma.done [#allocation3], 128
    $region25: #{tpu_custom_call.1} parent=1 // pred_fallthru
      _
    // Predicated region
    $region26: #{tpu_custom_call.1} parent=1 // pred_check
      _
    $region27: #{tpu_custom_call.1} parent=1 // pred_check_branch
      %80 = sbr.rel (0) target = $region29
    $region28: #{tpu_custom_call.1} parent=1 // pred_region
      %82 = dma.done [#allocation6], 2048
    $region29: #{tpu_custom_call.1} parent=1 // pred_fallthru
      _
    // Predicated region
    $region30: #{tpu_custom_call.1} parent=1 // pred_check
      _
    $region31: #{tpu_custom_call.1} parent=1 // pred_check_branch
      %84 = sbr.rel (0) target = $region33
    $region32: #{tpu_custom_call.1} parent=1 // pred_region
      %86 = dma.done [#allocation6], 2048
    $region33: #{tpu_custom_call.1} parent=1 // pred_fallthru
      _
    // Predicated region
    $region34: #{tpu_custom_call.1} parent=1 // pred_check
      _
    $region35: #{tpu_custom_call.1} parent=1 // pred_check_branch
      %88 = sbr.rel (0) target = $region37
    $region36: #{tpu_custom_call.1} parent=1 // pred_region
      %90 = dma.done [#allocation9], 2048
    $region37: #{tpu_custom_call.1} parent=1 // pred_fallthru
      _
    // Predicated region
    $region38: #{tpu_custom_call.1} parent=1 // pred_check
      _
    $region39: #{tpu_custom_call.1} parent=1 // pred_check_branch
      %92 = sbr.rel (0) target = $region41
    $region40: #{tpu_custom_call.1} parent=1 // pred_region
      %94 = dma.done [#allocation9], 128
    $region41: #{tpu_custom_call.1} parent=1 // pred_fallthru
      _
    %v95 = vld [vmem:[#allocation10] sm:$0xff]
    %v96 = vld [vmem:[#allocation2] sm:$0xff]
    %v97 = vld [vmem:[#allocation5] sm:$0xff]
    %v98 = vld [vmem:[#allocation5 + $0x8] sm:$0xff]
    %v99 = vld [vmem:[#allocation5 + $0x10] sm:$0xff]
    %v100 = vld [vmem:[#allocation5 + $0x18] sm:$0xff]
    %v101 = vld [vmem:[#allocation5 + $0x20] sm:$0xff]
    %v102 = vld [vmem:[#allocation5 + $0x28] sm:$0xff]
    %v103 = vld [vmem:[#allocation5 + $0x30] sm:$0xff]
    %v104 = vld [vmem:[#allocation5 + $0x38] sm:$0xff]
    %v105 = vld [vmem:[#allocation5 + $0x40] sm:$0xff]
    %v106 = vld [vmem:[#allocation5 + $0x48] sm:$0xff]
    %v107 = vld [vmem:[#allocation5 + $0x50] sm:$0xff]
    %v108 = vld [vmem:[#allocation5 + $0x58] sm:$0xff]
    %v109 = vld [vmem:[#allocation5 + $0x60] sm:$0xff]
    %v110 = vld [vmem:[#allocation5 + $0x68] sm:$0xff]
    %v111 = vld [vmem:[#allocation5 + $0x70] sm:$0xff]
    %v112 = vld [vmem:[#allocation5 + $0x78] sm:$0xff]
    %v113 = vperm.slane %v95, 0
    %114 = vmatpush.msra.mxu0 %v112
    %115 = vmatpush.msra.mxu0 %v111
    %116 = vmatpush.msra.mxu0 %v110
    %117 = vmatpush.msra.mxu0 %v109
    %118 = vmatpush.msra.mxu0 %v108
    %119 = vmatpush.msra.mxu0 %v107
    %120 = vmatpush.msra.mxu0 %v106
    %121 = vmatpush.msra.mxu0 %v105
    %122 = vmatpush.msra.mxu0 %v104
    %123 = vmatpush.msra.mxu0 %v103
    %124 = vmatpush.msra.mxu0 %v102
    %125 = vmatpush.msra.mxu0 %v101
    %126 = vmatpush.msra.mxu0 %v100
    %127 = vmatpush.msra.mxu0 %v99
    %128 = vmatpush.msra.mxu0 %v98
    %129 = vmatpush.msra.mxu0 %v97
    %130 = vmatmul.f32.gmra.mxu0 %v96
    %v131 = vpop.f32.mrf.mxu0
    %v132 = vadd.f32 %v113, %v131
    %133 = vdwg.mxu0
    %v134 = vmul.f32 %v132, 0.5
    %v135 = vmul.f32 %v132, 0.70710677
    %v136 = vmul.f32 %v135, %v135
    %v137 = vmin.f32 16.0, %v136
    %v138 = vmul.f32 %v137, 2.1237322e-06
    %v139 = vadd.f32 %v138, 0.00028619796
    %v140 = vmul.f32 %v137, %v139
    %v141 = vadd.f32 %v140, 0.0036580483
    %v142 = vmul.f32 %v137, %v141
    %v143 = vadd.f32 %v142, 0.05243302
    %v144 = vmul.f32 %v137, %v143
    %v145 = vadd.f32 %v144, 0.18741608
    %v146 = vmul.f32 %v137, %v145
    %v147 = vadd.f32 %v146, 1.1283791
    %v148 = vmul.f32 %v135, %v147
    %v149 = vmul.f32 %v137, 3.8918573e-05
    %v150 = vadd.f32 %v149, 0.001143296
    %v151 = vmul.f32 %v137, %v150
    %v152 = vadd.f32 %v151, 0.014752088
    %v153 = vmul.f32 %v137, %v152
    %v154 = vadd.f32 %v153, 0.112945676
    %v155 = vmul.f32 %v137, %v154
    %v156 = vadd.f32 %v155, 0.4994258
    %v157 = vmul.f32 %v137, %v156
    %v158 = vadd.f32 %v157, 1.0
    %v159 = vrcp.pop %v158
    %v160 = vmul.f32 %v158, %v159
    %v161 = vsub.f32 1.0, %v160
    %v162 = vmul.f32 %v159, %v161
    %v163 = vadd.f32 %v159, %v162
    %vm164 = vweird.f32 %v158
    %vm165 = vweird.f32 %v159
    %vm166 = vmor %vm164, %vm165
    %v167 = vsel %vm166, %v159, %v163
    %v168 = vand.u32 2147483647, %v158
    %vm169 = vcmp.eq.f32.partialorder %v168, 8.507059e+37
    %v170 = vand.u32 %v158, 2147483648
    %v171 = vor.u32 1.1754944e-38, %v170
    %v172 = vsel %vm169, %v171, %v167
    %v173 = vmul.f32 %v148, %v172
    %v174 = vmin.f32 %v173, 1.0
    %v175 = vmax.f32 %v174, -1.0
    %v176 = vadd.f32 %v175, 1.0
    %v177 = vmul.f32 %v134, %v176
    %v178 = vld [vmem:[#allocation7] sm:$0xff]
    %v179 = vld [vmem:[#allocation7 + $0x8] sm:$0xff]
    %v180 = vld [vmem:[#allocation7 + $0x10] sm:$0xff]
    %v181 = vld [vmem:[#allocation7 + $0x18] sm:$0xff]
    %v182 = vld [vmem:[#allocation7 + $0x20] sm:$0xff]
    %v183 = vld [vmem:[#allocation7 + $0x28] sm:$0xff]
    %v184 = vld [vmem:[#allocation7 + $0x30] sm:$0xff]
    %v185 = vld [vmem:[#allocation7 + $0x38] sm:$0xff]
    %v186 = vld [vmem:[#allocation7 + $0x40] sm:$0xff]
    %v187 = vld [vmem:[#allocation7 + $0x48] sm:$0xff]
    %v188 = vld [vmem:[#allocation7 + $0x50] sm:$0xff]
    %v189 = vld [vmem:[#allocation7 + $0x58] sm:$0xff]
    %v190 = vld [vmem:[#allocation7 + $0x60] sm:$0xff]
    %v191 = vld [vmem:[#allocation7 + $0x68] sm:$0xff]
    %v192 = vld [vmem:[#allocation7 + $0x70] sm:$0xff]
    %v193 = vld [vmem:[#allocation7 + $0x78] sm:$0xff]
    %v194 = vperm.slane %v95, 1
    %195 = vmatpush.msra.mxu0 %v193
    %196 = vmatpush.msra.mxu0 %v192
    %197 = vmatpush.msra.mxu0 %v191
    %198 = vmatpush.msra.mxu0 %v190
    %199 = vmatpush.msra.mxu0 %v189
    %200 = vmatpush.msra.mxu0 %v188
    %201 = vmatpush.msra.mxu0 %v187
    %202 = vmatpush.msra.mxu0 %v186
    %203 = vmatpush.msra.mxu0 %v185
    %204 = vmatpush.msra.mxu0 %v184
    %205 = vmatpush.msra.mxu0 %v183
    %206 = vmatpush.msra.mxu0 %v182
    %207 = vmatpush.msra.mxu0 %v181
    %208 = vmatpush.msra.mxu0 %v180
    %209 = vmatpush.msra.mxu0 %v179
    %210 = vmatpush.msra.mxu0 %v178
    %211 = vmatmul.f32.gmra.mxu0 %v177
    %v212 = vpop.f32.mrf.mxu0
    %v213 = vadd.f32 %v194, %v212
    %214 = vdwg.mxu0
    %v215 = vmul.f32 %v213, 0.5
    %v216 = vmul.f32 %v213, 0.70710677
    %v217 = vmul.f32 %v216, %v216
    %v218 = vmin.f32 16.0, %v217
    %v219 = vmul.f32 %v218, 2.1237322e-06
    %v220 = vadd.f32 %v219, 0.00028619796
    %v221 = vmul.f32 %v218, %v220
    %v222 = vadd.f32 %v221, 0.0036580483
    %v223 = vmul.f32 %v218, %v222
    %v224 = vadd.f32 %v223, 0.05243302
    %v225 = vmul.f32 %v218, %v224
    %v226 = vadd.f32 %v225, 0.18741608
    %v227 = vmul.f32 %v218, %v226
    %v228 = vadd.f32 %v227, 1.1283791
    %v229 = vmul.f32 %v216, %v228
    %v230 = vmul.f32 %v218, 3.8918573e-05
    %v231 = vadd.f32 %v230, 0.001143296
    %v232 = vmul.f32 %v218, %v231
    %v233 = vadd.f32 %v232, 0.014752088
    %v234 = vmul.f32 %v218, %v233
    %v235 = vadd.f32 %v234, 0.112945676
    %v236 = vmul.f32 %v218, %v235
    %v237 = vadd.f32 %v236, 0.4994258
    %v238 = vmul.f32 %v218, %v237
    %v239 = vadd.f32 %v238, 1.0
    %v240 = vrcp.pop %v239
    %v241 = vmul.f32 %v239, %v240
    %v242 = vsub.f32 1.0, %v241
    %v243 = vmul.f32 %v240, %v242
    %v244 = vadd.f32 %v240, %v243
    %vm245 = vweird.f32 %v239
    %vm246 = vweird.f32 %v240
    %vm247 = vmor %vm245, %vm246
    %v248 = vsel %vm247, %v240, %v244
    %v249 = vand.u32 2147483647, %v239
    %vm250 = vcmp.eq.f32.partialorder %v249, 8.507059e+37
    %v251 = vand.u32 %v239, 2147483648
    %v252 = vor.u32 1.1754944e-38, %v251
    %v253 = vsel %vm250, %v252, %v248
    %v254 = vmul.f32 %v229, %v253
    %v255 = vmin.f32 %v254, 1.0
    %v256 = vmax.f32 %v255, -1.0
    %v257 = vadd.f32 %v256, 1.0
    %v258 = vmul.f32 %v215, %v257
    %v259 = vld [vmem:[#allocation8] sm:$0xff]
    %v260 = vld [vmem:[#allocation8 + $0x8] sm:$0xff]
    %v261 = vld [vmem:[#allocation8 + $0x10] sm:$0xff]
    %v262 = vld [vmem:[#allocation8 + $0x18] sm:$0xff]
    %v263 = vld [vmem:[#allocation8 + $0x20] sm:$0xff]
    %v264 = vld [vmem:[#allocation8 + $0x28] sm:$0xff]
    %v265 = vld [vmem:[#allocation8 + $0x30] sm:$0xff]
    %v266 = vld [vmem:[#allocation8 + $0x38] sm:$0xff]
    %v267 = vld [vmem:[#allocation8 + $0x40] sm:$0xff]
    %v268 = vld [vmem:[#allocation8 + $0x48] sm:$0xff]
    %v269 = vld [vmem:[#allocation8 + $0x50] sm:$0xff]
    %v270 = vld [vmem:[#allocation8 + $0x58] sm:$0xff]
    %v271 = vld [vmem:[#allocation8 + $0x60] sm:$0xff]
    %v272 = vld [vmem:[#allocation8 + $0x68] sm:$0xff]
    %v273 = vld [vmem:[#allocation8 + $0x70] sm:$0xff]
    %v274 = vld [vmem:[#allocation8 + $0x78] sm:$0xff]
    %v275 = vperm.slane %v95, 2
    %276 = vmatpush.msra.mxu0 %v274
    %277 = vmatpush.msra.mxu0 %v273
    %278 = vmatpush.msra.mxu0 %v272
    %279 = vmatpush.msra.mxu0 %v271
    %280 = vmatpush.msra.mxu0 %v270
    %281 = vmatpush.msra.mxu0 %v269
    %282 = vmatpush.msra.mxu0 %v268
    %283 = vmatpush.msra.mxu0 %v267
    %284 = vmatpush.msra.mxu0 %v266
    %285 = vmatpush.msra.mxu0 %v265
    %286 = vmatpush.msra.mxu0 %v264
    %287 = vmatpush.msra.mxu0 %v263
    %288 = vmatpush.msra.mxu0 %v262
    %289 = vmatpush.msra.mxu0 %v261
    %290 = vmatpush.msra.mxu0 %v260
    %291 = vmatpush.msra.mxu0 %v259
    %292 = vmatmul.f32.gmra.mxu0 %v258
    %v293 = vpop.f32.mrf.mxu0
    %v294 = vadd.f32 %v275, %v293
    %295 = vdwg.mxu0
    %296 = vst [vmem:[#allocation11] sm:$0xff] %v294
    // Predicated region
    $region42: #{tpu_custom_call.1} parent=1 // pred_check
      _
    $region43: #{tpu_custom_call.1} parent=1 // pred_check_branch
      %298 = sbr.rel (0) target = $region45
    $region44: #{tpu_custom_call.1} parent=1 // pred_region
      %300 = vsyncadd [#allocation4], 0
      %s302 = sshll.u32 [#allocation11], 4
      %s303 = int_to_ptr.vmem [resolvable:$true] %s302
      %s304 = sshll.u32 %s5, 4
      %s305 = int_to_ptr.hbm [resolvable:$true] %s304
      %307 = dma.vmem_to_hbm [thread:$0]  %s303, 128, %s305, [#allocation4]
    $region45: #{tpu_custom_call.1} parent=1 // pred_fallthru
      _
    // Predicated region
    $region46: #{tpu_custom_call.1} parent=1 // pred_check
      _
    $region47: #{tpu_custom_call.1} parent=1 // pred_check_branch
      %309 = sbr.rel (0) target = $region49
    $region48: #{tpu_custom_call.1} parent=1 // pred_region
      %311 = dma.done [#allocation4], 128
    $region49: #{tpu_custom_call.1} parent=1 // pred_fallthru
      _
    %312 = vsyncpa [#allocation3], 1
    %313 = vsyncpa [#allocation6], 1
    %314 = vsyncpa [#allocation9], 1
    %315 = vsyncpa [#allocation4], 1

// kernel: tpu_custom_call.1
$region0: #{tpu_custom_call.1}
  #allocation0 [shape = 'u32[]', space=smem, size = 0x4, offset = 0x4, fixed_abs, tag = 'smem constant byte address 0x4 - core index']
  #allocation1 [shape = 'u32[72,128]{1,0:T(1,128)}', space=vmem, size = 0x9000, scoped, tag = 'internal scratch']
  %s0 = inlined_call_operand.hbm [shape: f32[8,128], index: 0, kind: input, shape index: {}]
  %s1 = inlined_call_operand.hbm [shape: f32[128,128], index: 1, kind: input, shape index: {}]
  %s2 = inlined_call_operand.hbm [shape: f32[128,128], index: 2, kind: input, shape index: {}]
  %s3 = inlined_call_operand.hbm [shape: f32[128,128], index: 3, kind: input, shape index: {}]
  %s4 = inlined_call_operand.hbm [shape: f32[8,128], index: 4, kind: input, shape index: {}]
  %s5 = inlined_call_operand.hbm [shape: f32[8,128], index: 5, kind: output, shape index: {}]
  %s6 = sld [smem:[#allocation0]]
  $region50: #{tpu_custom_call.1} parent=0
    _
  %s8 = ssub.s32 1, %s6
  %s9 = scalar_select 0, %s8, %s6
  $region1: #{tpu_custom_call.1} parent=0
    #allocation2 [shape = 'u8[4096]{0}', space=vmem, size = 0x1000, scoped, tag = 'input window, operand 0, single buffered']
    #allocation3 [shape = 's32[1]{0}', space=sflag, size = 0x4, scoped, tag = 'scoped memory for tpu_custom_call.1']
    #allocation4 [shape = 's32[1]{0}', space=sflag, size = 0x4, scoped, tag = 'scoped memory for tpu_custom_call.1']
    #allocation5 [shape = 'u8[65536]{0}', space=vmem, size = 0x10000, scoped, tag = 'input window, operand 1, single buffered']
    #allocation6 [shape = 's32[1]{0}', space=sflag, size = 0x4, scoped, tag = 'scoped memory for tpu_custom_call.1']
    #allocation7 [shape = 'u8[65536]{0}', space=vmem, size = 0x10000, scoped, tag = 'input window, operand 2, single buffered']
    #allocation8 [shape = 'u8[65536]{0}', space=vmem, size = 0x10000, scoped, tag = 'input window, operand 3, single buffered']
    #allocation9 [shape = 's32[1]{0}', space=sflag, size = 0x4, scoped, tag = 'scoped memory for tpu_custom_call.1']
    #allocation10 [shape = 'u8[4096]{0}', space=vmem, size = 0x1000, scoped, tag = 'input window, operand 4, single buffered']
    #allocation11 [shape = 'u8[4096]{0}', space=vmem, size = 0x1000, scoped, tag = 'output window, operand 0, single buffered']
    %10 = vsyncpa [#allocation3], 0
    %11 = vsyncpa [#allocation6], 0
    %12 = vsyncpa [#allocation9], 0
    %13 = vsyncpa [#allocation4], 0
    // Predicated region
    $region2: #{tpu_custom_call.1} parent=1 // pred_check
      _
    $region3: #{tpu_custom_call.1} parent=1 // pred_check_branch
      %15 = sbr.rel (0) target = $region5
    $region4: #{tpu_custom_call.1} parent=1 // pred_region
      %17 = vsyncadd [#allocation3], 0
      %s19 = sshll.u32 %s0, 4
      %s20 = int_to_ptr.hbm [resolvable:$true] %s19
      %s21 = sshll.u32 [#allocation2], 4
      %s22 = int_to_ptr.vmem [resolvable:$true] %s21
      %24 = dma.hbm_to_vmem [thread:$0]  %s20, 128, %s22, [#allocation3]
    $region5: #{tpu_custom_call.1} parent=1 // pred_fallthru
      _
    // Predicated region
    $region6: #{tpu_custom_call.1} parent=1 // pred_check
      _
    $region7: #{tpu_custom_call.1} parent=1 // pred_check_branch
      %26 = sbr.rel (0) target = $region9
    $region8: #{tpu_custom_call.1} parent=1 // pred_region
      %28 = vsyncadd [#allocation6], 0
      %s29 = sshll.u32 %s1, 4
      %s30 = int_to_ptr.hbm [resolvable:$true] %s29
      %s31 = sshll.u32 [#allocation5], 4
      %s32 = int_to_ptr.vmem [resolvable:$true] %s31
      %37 = dma.hbm_to_vmem [thread:$0]  %s30, 2048, %s32, [#allocation6], 128, 128, 8
    $region9: #{tpu_custom_call.1} parent=1 // pred_fallthru
      _
    // Predicated region
    $region10: #{tpu_custom_call.1} parent=1 // pred_check
      _
    $region11: #{tpu_custom_call.1} parent=1 // pred_check_branch
      %39 = sbr.rel (0) target = $region13
    $region12: #{tpu_custom_call.1} parent=1 // pred_region
      %41 = vsyncadd [#allocation6], 0
      %s42 = sshll.u32 %s2, 4
      %s43 = int_to_ptr.hbm [resolvable:$true] %s42
      %s44 = sshll.u32 [#allocation7], 4
      %s45 = int_to_ptr.vmem [resolvable:$true] %s44
      %50 = dma.hbm_to_vmem [thread:$0]  %s43, 2048, %s45, [#allocation6], 128, 128, 8
    $region13: #{tpu_custom_call.1} parent=1 // pred_fallthru
      _
    // Predicated region
    $region14: #{tpu_custom_call.1} parent=1 // pred_check
      _
    $region15: #{tpu_custom_call.1} parent=1 // pred_check_branch
      %52 = sbr.rel (0) target = $region17
    $region16: #{tpu_custom_call.1} parent=1 // pred_region
      %54 = vsyncadd [#allocation9], 0
      %s55 = sshll.u32 %s3, 4
      %s56 = int_to_ptr.hbm [resolvable:$true] %s55
      %s57 = sshll.u32 [#allocation8], 4
      %s58 = int_to_ptr.vmem [resolvable:$true] %s57
      %63 = dma.hbm_to_vmem [thread:$0]  %s56, 2048, %s58, [#allocation9], 128, 128, 8
    $region17: #{tpu_custom_call.1} parent=1 // pred_fallthru
      _
    // Predicated region
    $region18: #{tpu_custom_call.1} parent=1 // pred_check
      _
    $region19: #{tpu_custom_call.1} parent=1 // pred_check_branch
      %65 = sbr.rel (0) target = $region21
    $region20: #{tpu_custom_call.1} parent=1 // pred_region
      %67 = vsyncadd [#allocation9], 0
      %s69 = sshll.u32 %s4, 4
      %s70 = int_to_ptr.hbm [resolvable:$true] %s69
      %s71 = sshll.u32 [#allocation10], 4
      %s72 = int_to_ptr.vmem [resolvable:$true] %s71
      %74 = dma.hbm_to_vmem [thread:$0]  %s70, 128, %s72, [#allocation9]
    $region21: #{tpu_custom_call.1} parent=1 // pred_fallthru
      _
    // Predicated region
    $region22: #{tpu_custom_call.1} parent=1 // pred_check
      _
    $region23: #{tpu_custom_call.1} parent=1 // pred_check_branch
      %76 = sbr.rel (0) target = $region25
    $region24: #{tpu_custom_call.1} parent=1 // pred_region
      %78 = dma.done [#allocation3], 128
    $region25: #{tpu_custom_call.1} parent=1 // pred_fallthru
      _
    // Predicated region
    $region26: #{tpu_custom_call.1} parent=1 // pred_check
      _
    $region27: #{tpu_custom_call.1} parent=1 // pred_check_branch
      %80 = sbr.rel (0) target = $region29
    $region28: #{tpu_custom_call.1} parent=1 // pred_region
      %82 = dma.done [#allocation6], 2048
    $region29: #{tpu_custom_call.1} parent=1 // pred_fallthru
      _
    // Predicated region
    $region30: #{tpu_custom_call.1} parent=1 // pred_check
      _
    $region31: #{tpu_custom_call.1} parent=1 // pred_check_branch
      %84 = sbr.rel (0) target = $region33
    $region32: #{tpu_custom_call.1} parent=1 // pred_region
      %86 = dma.done [#allocation6], 2048
    $region33: #{tpu_custom_call.1} parent=1 // pred_fallthru
      _
    // Predicated region
    $region34: #{tpu_custom_call.1} parent=1 // pred_check
      _
    $region35: #{tpu_custom_call.1} parent=1 // pred_check_branch
      %88 = sbr.rel (0) target = $region37
    $region36: #{tpu_custom_call.1} parent=1 // pred_region
      %90 = dma.done [#allocation9], 2048
    $region37: #{tpu_custom_call.1} parent=1 // pred_fallthru
      _
    // Predicated region
    $region38: #{tpu_custom_call.1} parent=1 // pred_check
      _
    $region39: #{tpu_custom_call.1} parent=1 // pred_check_branch
      %92 = sbr.rel (0) target = $region41
    $region40: #{tpu_custom_call.1} parent=1 // pred_region
      %94 = dma.done [#allocation9], 128
    $region41: #{tpu_custom_call.1} parent=1 // pred_fallthru
      _
    %v95 = vld [vmem:[#allocation10] sm:$0xff]
    %v96 = vld [vmem:[#allocation2] sm:$0xff]
    %v97 = vld [vmem:[#allocation5] sm:$0xff]
    %v98 = vld [vmem:[#allocation5 + $0x8] sm:$0xff]
    %v99 = vld [vmem:[#allocation5 + $0x10] sm:$0xff]
    %v100 = vld [vmem:[#allocation5 + $0x18] sm:$0xff]
    %v101 = vld [vmem:[#allocation5 + $0x20] sm:$0xff]
    %v102 = vld [vmem:[#allocation5 + $0x28] sm:$0xff]
    %v103 = vld [vmem:[#allocation5 + $0x30] sm:$0xff]
    %v104 = vld [vmem:[#allocation5 + $0x38] sm:$0xff]
    %v105 = vld [vmem:[#allocation5 + $0x40] sm:$0xff]
    %v106 = vld [vmem:[#allocation5 + $0x48] sm:$0xff]
    %v107 = vld [vmem:[#allocation5 + $0x50] sm:$0xff]
    %v108 = vld [vmem:[#allocation5 + $0x58] sm:$0xff]
    %v109 = vld [vmem:[#allocation5 + $0x60] sm:$0xff]
    %v110 = vld [vmem:[#allocation5 + $0x68] sm:$0xff]
    %v111 = vld [vmem:[#allocation5 + $0x70] sm:$0xff]
    %v112 = vld [vmem:[#allocation5 + $0x78] sm:$0xff]
    %v113 = vperm.slane %v95, 0
    %114 = vmatpush.msra.mxu0 %v112
    %115 = vmatpush.msra.mxu0 %v111
    %116 = vmatpush.msra.mxu0 %v110
    %117 = vmatpush.msra.mxu0 %v109
    %118 = vmatpush.msra.mxu0 %v108
    %119 = vmatpush.msra.mxu0 %v107
    %120 = vmatpush.msra.mxu0 %v106
    %121 = vmatpush.msra.mxu0 %v105
    %122 = vmatpush.msra.mxu0 %v104
    %123 = vmatpush.msra.mxu0 %v103
    %124 = vmatpush.msra.mxu0 %v102
    %125 = vmatpush.msra.mxu0 %v101
    %126 = vmatpush.msra.mxu0 %v100
    %127 = vmatpush.msra.mxu0 %v99
    %128 = vmatpush.msra.mxu0 %v98
    %129 = vmatpush.msra.mxu0 %v97
    %130 = vmatmul.f32.gmra.mxu0 %v96
    %v131 = vpop.f32.mrf.mxu0
    %v132 = vadd.f32 %v113, %v131
    %133 = vdwg.mxu0
    %v134 = vmul.f32 %v132, 0.5
    %v135 = vmul.f32 %v132, 0.70710677
    %v136 = vmul.f32 %v135, %v135
    %v137 = vmin.f32 16.0, %v136
    %v138 = vmul.f32 %v137, 2.1237322e-06
    %v139 = vadd.f32 %v138, 0.00028619796
    %v140 = vmul.f32 %v137, %v139
    %v141 = vadd.f32 %v140, 0.0036580483
    %v142 = vmul.f32 %v137, %v141
    %v143 = vadd.f32 %v142, 0.05243302
    %v144 = vmul.f32 %v137, %v143
    %v145 = vadd.f32 %v144, 0.18741608
    %v146 = vmul.f32 %v137, %v145
    %v147 = vadd.f32 %v146, 1.1283791
    %v148 = vmul.f32 %v135, %v147
    %v149 = vmul.f32 %v137, 3.8918573e-05
    %v150 = vadd.f32 %v149, 0.001143296
    %v151 = vmul.f32 %v137, %v150
    %v152 = vadd.f32 %v151, 0.014752088
    %v153 = vmul.f32 %v137, %v152
    %v154 = vadd.f32 %v153, 0.112945676
    %v155 = vmul.f32 %v137, %v154
    %v156 = vadd.f32 %v155, 0.4994258
    %v157 = vmul.f32 %v137, %v156
    %v158 = vadd.f32 %v157, 1.0
    %v159 = vrcp.pop %v158
    %v160 = vmul.f32 %v158, %v159
    %v161 = vsub.f32 1.0, %v160
    %v162 = vmul.f32 %v159, %v161
    %v163 = vadd.f32 %v159, %v162
    %vm164 = vweird.f32 %v158
    %vm165 = vweird.f32 %v159
    %vm166 = vmor %vm164, %vm165
    %v167 = vsel %vm166, %v159, %v163
    %v168 = vand.u32 2147483647, %v158
    %vm169 = vcmp.eq.f32.partialorder %v168, 8.507059e+37
    %v170 = vand.u32 %v158, 2147483648
    %v171 = vor.u32 1.1754944e-38, %v170
    %v172 = vsel %vm169, %v171, %v167
    %v173 = vmul.f32 %v148, %v172
    %v174 = vmin.f32 %v173, 1.0
    %v175 = vmax.f32 %v174, -1.0
    %v176 = vadd.f32 %v175, 1.0
    %v177 = vmul.f32 %v134, %v176
    %v178 = vld [vmem:[#allocation7] sm:$0xff]
    %v179 = vld [vmem:[#allocation7 + $0x8] sm:$0xff]
    %v180 = vld [vmem:[#allocation7 + $0x10] sm:$0xff]
    %v181 = vld [vmem:[#allocation7 + $0x18] sm:$0xff]
    %v182 = vld [vmem:[#allocation7 + $0x20] sm:$0xff]
    %v183 = vld [vmem:[#allocation7 + $0x28] sm:$0xff]
    %v184 = vld [vmem:[#allocation7 + $0x30] sm:$0xff]
    %v185 = vld [vmem:[#allocation7 + $0x38] sm:$0xff]
    %v186 = vld [vmem:[#allocation7 + $0x40] sm:$0xff]
    %v187 = vld [vmem:[#allocation7 + $0x48] sm:$0xff]
    %v188 = vld [vmem:[#allocation7 + $0x50] sm:$0xff]
    %v189 = vld [vmem:[#allocation7 + $0x58] sm:$0xff]
    %v190 = vld [vmem:[#allocation7 + $0x60] sm:$0xff]
    %v191 = vld [vmem:[#allocation7 + $0x68] sm:$0xff]
    %v192 = vld [vmem:[#allocation7 + $0x70] sm:$0xff]
    %v193 = vld [vmem:[#allocation7 + $0x78] sm:$0xff]
    %v194 = vperm.slane %v95, 1
    %195 = vmatpush.msra.mxu0 %v193
    %196 = vmatpush.msra.mxu0 %v192
    %197 = vmatpush.msra.mxu0 %v191
    %198 = vmatpush.msra.mxu0 %v190
    %199 = vmatpush.msra.mxu0 %v189
    %200 = vmatpush.msra.mxu0 %v188
    %201 = vmatpush.msra.mxu0 %v187
    %202 = vmatpush.msra.mxu0 %v186
    %203 = vmatpush.msra.mxu0 %v185
    %204 = vmatpush.msra.mxu0 %v184
    %205 = vmatpush.msra.mxu0 %v183
    %206 = vmatpush.msra.mxu0 %v182
    %207 = vmatpush.msra.mxu0 %v181
    %208 = vmatpush.msra.mxu0 %v180
    %209 = vmatpush.msra.mxu0 %v179
    %210 = vmatpush.msra.mxu0 %v178
    %211 = vmatmul.f32.gmra.mxu0 %v177
    %v212 = vpop.f32.mrf.mxu0
    %v213 = vadd.f32 %v194, %v212
    %214 = vdwg.mxu0
    %v215 = vmul.f32 %v213, 0.5
    %v216 = vmul.f32 %v213, 0.70710677
    %v217 = vmul.f32 %v216, %v216
    %v218 = vmin.f32 16.0, %v217
    %v219 = vmul.f32 %v218, 2.1237322e-06
    %v220 = vadd.f32 %v219, 0.00028619796
    %v221 = vmul.f32 %v218, %v220
    %v222 = vadd.f32 %v221, 0.0036580483
    %v223 = vmul.f32 %v218, %v222
    %v224 = vadd.f32 %v223, 0.05243302
    %v225 = vmul.f32 %v218, %v224
    %v226 = vadd.f32 %v225, 0.18741608
    %v227 = vmul.f32 %v218, %v226
    %v228 = vadd.f32 %v227, 1.1283791
    %v229 = vmul.f32 %v216, %v228
    %v230 = vmul.f32 %v218, 3.8918573e-05
    %v231 = vadd.f32 %v230, 0.001143296
    %v232 = vmul.f32 %v218, %v231
    %v233 = vadd.f32 %v232, 0.014752088
    %v234 = vmul.f32 %v218, %v233
    %v235 = vadd.f32 %v234, 0.112945676
    %v236 = vmul.f32 %v218, %v235
    %v237 = vadd.f32 %v236, 0.4994258
    %v238 = vmul.f32 %v218, %v237
    %v239 = vadd.f32 %v238, 1.0
    %v240 = vrcp.pop %v239
    %v241 = vmul.f32 %v239, %v240
    %v242 = vsub.f32 1.0, %v241
    %v243 = vmul.f32 %v240, %v242
    %v244 = vadd.f32 %v240, %v243
    %vm245 = vweird.f32 %v239
    %vm246 = vweird.f32 %v240
    %vm247 = vmor %vm245, %vm246
    %v248 = vsel %vm247, %v240, %v244
    %v249 = vand.u32 2147483647, %v239
    %vm250 = vcmp.eq.f32.partialorder %v249, 8.507059e+37
    %v251 = vand.u32 %v239, 2147483648
    %v252 = vor.u32 1.1754944e-38, %v251
    %v253 = vsel %vm250, %v252, %v248
    %v254 = vmul.f32 %v229, %v253
    %v255 = vmin.f32 %v254, 1.0
    %v256 = vmax.f32 %v255, -1.0
    %v257 = vadd.f32 %v256, 1.0
    %v258 = vmul.f32 %v215, %v257
    %v259 = vld [vmem:[#allocation8] sm:$0xff]
    %v260 = vld [vmem:[#allocation8 + $0x8] sm:$0xff]
    %v261 = vld [vmem:[#allocation8 + $0x10] sm:$0xff]
    %v262 = vld [vmem:[#allocation8 + $0x18] sm:$0xff]
    %v263 = vld [vmem:[#allocation8 + $0x20] sm:$0xff]
    %v264 = vld [vmem:[#allocation8 + $0x28] sm:$0xff]
    %v265 = vld [vmem:[#allocation8 + $0x30] sm:$0xff]
    %v266 = vld [vmem:[#allocation8 + $0x38] sm:$0xff]
    %v267 = vld [vmem:[#allocation8 + $0x40] sm:$0xff]
    %v268 = vld [vmem:[#allocation8 + $0x48] sm:$0xff]
    %v269 = vld [vmem:[#allocation8 + $0x50] sm:$0xff]
    %v270 = vld [vmem:[#allocation8 + $0x58] sm:$0xff]
    %v271 = vld [vmem:[#allocation8 + $0x60] sm:$0xff]
    %v272 = vld [vmem:[#allocation8 + $0x68] sm:$0xff]
    %v273 = vld [vmem:[#allocation8 + $0x70] sm:$0xff]
    %v274 = vld [vmem:[#allocation8 + $0x78] sm:$0xff]
    %v275 = vperm.slane %v95, 2
    %276 = vmatpush.msra.mxu0 %v274
    %277 = vmatpush.msra.mxu0 %v273
    %278 = vmatpush.msra.mxu0 %v272
    %279 = vmatpush.msra.mxu0 %v271
    %280 = vmatpush.msra.mxu0 %v270
    %281 = vmatpush.msra.mxu0 %v269
    %282 = vmatpush.msra.mxu0 %v268
    %283 = vmatpush.msra.mxu0 %v267
    %284 = vmatpush.msra.mxu0 %v266
    %285 = vmatpush.msra.mxu0 %v265
    %286 = vmatpush.msra.mxu0 %v264
    %287 = vmatpush.msra.mxu0 %v263
    %288 = vmatpush.msra.mxu0 %v262
    %289 = vmatpush.msra.mxu0 %v261
    %290 = vmatpush.msra.mxu0 %v260
    %291 = vmatpush.msra.mxu0 %v259
    %292 = vmatmul.f32.gmra.mxu0 %v258
    %v293 = vpop.f32.mrf.mxu0
    %v294 = vadd.f32 %v275, %v293
    %295 = vdwg.mxu0
    %296 = vst [vmem:[#allocation11] sm:$0xff] %v294
    // Predicated region
    $region42: #{tpu_custom_call.1} parent=1 // pred_check
      _
    $region43: #{tpu_custom_call.1} parent=1 // pred_check_branch
      %298 = sbr.rel (0) target = $region45
    $region44: #{tpu_custom_call.1} parent=1 // pred_region
      %300 = vsyncadd [#allocation4], 0
      %s302 = sshll.u32 [#allocation11], 4
      %s303 = int_to_ptr.vmem [resolvable:$true] %s302
      %s304 = sshll.u32 %s5, 4
      %s305 = int_to_ptr.hbm [resolvable:$true] %s304
      %307 = dma.vmem_to_hbm [thread:$0]  %s303, 128, %s305, [#allocation4]
    $region45: #{tpu_custom_call.1} parent=1 // pred_fallthru
      _
    // Predicated region
    $region46: #{tpu_custom_call.1} parent=1 // pred_check
      _
    $region47: #{tpu_custom_call.1} parent=1 // pred_check_branch
      %309 = sbr.rel (0) target = $region49
    $region48: #{tpu_custom_call.1} parent=1 // pred_region
      %311 = dma.done [#allocation4], 128
    $region49: #{tpu_custom_call.1} parent=1 // pred_fallthru
      _
    %312 = vsyncpa [#allocation3], 1
    %313 = vsyncpa [#allocation6], 1
    %314 = vsyncpa [#allocation9], 1
    %315 = vsyncpa [#allocation4], 1

</llo_original>
